<compile_context>
chip_gen: v5e
topology: v5e:2x2
jax: 0.10.0
libtpu: 0.0.40
codegen_flags: <defaults>
</compile_context>

<pallas_src>
import jax
import jax.numpy as jnp
from jax.experimental import pallas as pl
from jax.experimental.pallas import tpu as pltpu


def _choose_tile_n(N, C):
    """Largest row tile whose f32 working copy stays ~1 MiB (VMEM lane-padded)."""
    lanes = ((C + 127) // 128) * 128          # VMEM pads the lane axis to 128
    row_bytes = lanes * 4                     # f32 working copy per row
    budget = 1 * 1024 * 1024                  # per input buffer (double-buffered)
    max_rows = max(8, budget // row_bytes)
    max_rows = min(max_rows, 4096)
    if N <= max_rows:
        return N                              # single block: block == full dim
    return max(8, (max_rows // 8) * 8)        # multiple of 8 sublanes


def _make_focal_kernel(*, gamma, int_gamma, has_alpha, tile_n, n_valid, ragged):
    def kernel(*refs):
        if has_alpha:
            x_ref, t_ref, a_ref, out_ref = refs
        else:
            x_ref, t_ref, out_ref = refs
            a_ref = None

        x = x_ref[...].astype(jnp.float32)    # (tile_n, C)
        t = t_ref[...]                        # (tile_n, 1) int32

        # Numerically-stable log-sum-exp (the only full-tile transcendental).
        m = jnp.max(x, axis=1, keepdims=True)
        shifted = x - m
        lse = jnp.log(jnp.sum(jnp.exp(shifted), axis=1, keepdims=True))

        # One-hot mask of the target class.
        classes = jax.lax.broadcasted_iota(jnp.int32, x.shape, 1)
        one_hot = (classes == t).astype(jnp.float32)     # (tile_n, C)

        # Focal loss evaluated only at the target class (per row):
        #   lp_t = log softmax(x)[target] ; p_t = softmax(x)[target]
        lp_t = jnp.sum(one_hot * shifted, axis=1, keepdims=True) - lse
        p_t = jnp.exp(lp_t)                   # (tile_n, 1)

        w = 1.0 - p_t
        if int_gamma is not None:
            # Integer gamma (default gamma=2): repeated multiply, no pow/EUP.
            if int_gamma == 0:
                fw = jnp.ones_like(w)
            else:
                fw = w
                for _ in range(int_gamma - 1):
                    fw = fw * w
        else:
            fw = jnp.power(w, gamma)

        loss_row = -fw * lp_t                 # (tile_n, 1)

        if has_alpha:
            alpha = a_ref[...].astype(jnp.float32)       # (1, C)
            alpha_t = jnp.sum(one_hot * alpha, axis=1, keepdims=True)
            loss_row = loss_row * alpha_t

        if ragged:
            # Zero the padded tail rows of the last (partial) block.
            i = pl.program_id(0)
            row = i * tile_n + jax.lax.broadcasted_iota(
                jnp.int32, loss_row.shape, 0)
            loss_row = jnp.where(row < n_valid, loss_row, 0.0)

        block_sum = jnp.sum(loss_row, keepdims=True)     # (1, 1)
        out_ref[...] = jnp.zeros((8, 128), jnp.float32) + block_sum

    return kernel


def focal_loss(inputs, targets, *, gamma=2.0, alpha=None, reduction="mean"):
    """Pallas implementation of FocalLoss.forward for 2-D logits.

    inputs:  [N, C] float logits (f32 or bf16; upcast happens in-kernel)
    targets: [N] integer class labels
    """
    N, C = inputs.shape
    targets_2d = targets.astype(jnp.int32).reshape(N, 1)

    tile_n = _choose_tile_n(N, C)
    num_blocks = -(-N // tile_n)
    ragged = (num_blocks * tile_n) != N

    has_alpha = alpha is not None
    args = [inputs, targets_2d]
    in_specs = [
        pl.BlockSpec((tile_n, C), lambda i: (i, 0)),   # logits tile
        pl.BlockSpec((tile_n, 1), lambda i: (i, 0)),   # targets tile
    ]
    if has_alpha:
        alpha_vec = jnp.asarray(alpha, dtype=jnp.float32).reshape(1, C)
        args.append(alpha_vec)
        in_specs.append(pl.BlockSpec((1, C), lambda i: (0, 0)))  # shared alpha

    g = float(gamma)
    int_gamma = int(g) if (g.is_integer() and 0.0 <= g <= 8.0) else None

    kernel = _make_focal_kernel(gamma=g, int_gamma=int_gamma,
                                has_alpha=has_alpha, tile_n=tile_n,
                                n_valid=N, ragged=ragged)

    # One (8, 128) partial-sum block per grid step; summed in JAX below.
    partial_blocks = pl.pallas_call(
        kernel,
        out_shape=jax.ShapeDtypeStruct((num_blocks * 8, 128), jnp.float32),
        grid_spec=pltpu.PrefetchScalarGridSpec(
            num_scalar_prefetch=0,
            grid=(num_blocks,),
            in_specs=in_specs,
            out_specs=pl.BlockSpec((8, 128), lambda i: (i, 0)),
        ),
        compiler_params=pltpu.CompilerParams(
            dimension_semantics=("parallel",),
            vmem_limit_bytes=32 * 1024 * 1024,
        ),
    )(*args)

    total = jnp.sum(partial_blocks[::8, 0])   # one partial sum per block

    if reduction == "mean":
        return total / jnp.float32(N * C)
    elif reduction == "sum":
        return total
    else:
        # TODO(synk): reduction='none' (per-element [N, C] loss output) is not
        # wired into this kernel path; only 'mean'/'sum' are implemented.
        raise NotImplementedError("reduction must be 'mean' or 'sum'")


def _focal_loss_ref(inputs, targets, gamma=2.0, alpha=None, reduction="mean"):
    """Pure-JAX reference mirroring the PyTorch module."""
    probs = jax.nn.softmax(inputs.astype(jnp.float32), axis=1)
    one_hot = jax.nn.one_hot(targets, inputs.shape[1], dtype=jnp.float32)
    focal_weight = jnp.power(1.0 - probs, gamma)
    log_probs = jnp.log(probs)
    loss = -focal_weight * log_probs * one_hot
    if alpha is not None:
        alpha = jnp.asarray(alpha, dtype=jnp.float32)
        loss = loss * alpha[targets].reshape(-1, 1)
    if reduction == "mean":
        return loss.mean()
    return loss.sum()


if __name__ == "__main__":
    key = jax.random.PRNGKey(0)
    k_x, k_t = jax.random.split(key)

    N, C = 16, 8  # batch, num_classes
    logits = jax.random.normal(k_x, (N, C), dtype=jnp.float32)
    targets = jax.random.randint(k_t, (N,), 0, C, dtype=jnp.int32)

    # Default module config: gamma=2.0, alpha=None, reduction='mean'
    out = focal_loss(logits, targets, gamma=2.0, alpha=None, reduction="mean")
    out = jax.block_until_ready(out)

    ref = _focal_loss_ref(logits, targets, gamma=2.0, alpha=None,
                          reduction="mean")
    assert jnp.allclose(out, ref, rtol=1e-5, atol=1e-6), (out, ref)

    # Also exercise the alpha path (deterministic per-class weights).
    alpha = jnp.linspace(0.5, 1.5, C, dtype=jnp.float32)
    out_a = focal_loss(logits, targets, gamma=2.0, alpha=alpha,
                       reduction="sum")
    out_a = jax.block_until_ready(out_a)
    ref_a = _focal_loss_ref(logits, targets, gamma=2.0, alpha=alpha,
                            reduction="sum")
    assert jnp.allclose(out_a, ref_a, rtol=1e-5, atol=1e-6), (out_a, ref_a)

    print("KERNEL_OK")
</pallas_src>

<mosaic_0001>
module attributes {stable_mosaic.version = 11 : i64} {
  func.func @kernel(%arg0: i32, %arg1: memref<16x8xf32, #tpu.memory_space<vmem>>, %arg2: memref<16x1xi32, #tpu.memory_space<vmem>>, %arg3: memref<8x128xf32, #tpu.memory_space<vmem>>) attributes {dimension_semantics = [#tpu.dimension_semantics<parallel>], iteration_bounds = array<i64: 1>, scalar_prefetch = 0 : i64, scratch_operands = 0 : i64, tpu.core_type = #tpu.core_type<tc>, window_params = [{transform_indices = @transform_0, window_bounds = array<i64: 16, 8>}, {transform_indices = @transform_1, window_bounds = array<i64: 16, 1>}, {transform_indices = @transform_2, window_bounds = array<i64: 8, 128>}]} {
    %c0 = arith.constant 0 : index
    %c0_0 = arith.constant 0 : index
    %0 = vector.load %arg1[%c0, %c0_0] : memref<16x8xf32, #tpu.memory_space<vmem>>, vector<16x8xf32>
    %c0_1 = arith.constant 0 : index
    %c0_2 = arith.constant 0 : index
    %1 = vector.load %arg2[%c0_1, %c0_2] : memref<16x1xi32, #tpu.memory_space<vmem>>, vector<16x1xi32>
    %cst = arith.constant dense<0xFF800000> : vector<16xf32>
    %2 = vector.multi_reduction <maximumf>, %0, %cst [1] : vector<16x8xf32> to vector<16xf32>
    %3 = vector.shape_cast %2 : vector<16xf32> to vector<16x1xf32>
    %4 = vector.broadcast %3 : vector<16x1xf32> to vector<16x8xf32>
    %5 = arith.subf %0, %4 : vector<16x8xf32>
    %6 = math.exp %5 : vector<16x8xf32>
    %cst_3 = arith.constant dense<0.000000e+00> : vector<16xf32>
    %7 = vector.multi_reduction <add>, %6, %cst_3 [1] : vector<16x8xf32> to vector<16xf32>
    %8 = vector.shape_cast %7 : vector<16xf32> to vector<16x1xf32>
    %9 = math.log %8 : vector<16x1xf32>
    %10 = tpu.iota {dimensions = array<i32: 1>} : vector<16x8xi32>
    %11 = vector.broadcast %1 : vector<16x1xi32> to vector<16x8xi32>
    %12 = arith.cmpi eq, %10, %11 : vector<16x8xi32>
    %13 = arith.extui %12 : vector<16x8xi1> to vector<16x8xi32>
    %14 = arith.sitofp %13 : vector<16x8xi32> to vector<16x8xf32>
    %15 = arith.mulf %14, %5 : vector<16x8xf32>
    %cst_4 = arith.constant dense<0.000000e+00> : vector<16xf32>
    %16 = vector.multi_reduction <add>, %15, %cst_4 [1] : vector<16x8xf32> to vector<16xf32>
    %17 = vector.shape_cast %16 : vector<16xf32> to vector<16x1xf32>
    %18 = arith.subf %17, %9 : vector<16x1xf32>
    %19 = math.exp %18 : vector<16x1xf32>
    %cst_5 = arith.constant 1.000000e+00 : f32
    %20 = vector.broadcast %cst_5 : f32 to vector<16x1xf32>
    %21 = arith.subf %20, %19 : vector<16x1xf32>
    %22 = arith.mulf %21, %21 : vector<16x1xf32>
    %cst_6 = arith.constant 0.000000e+00 : f32
    %23 = vector.broadcast %cst_6 : f32 to vector<16x1xf32>
    %24 = arith.subf %23, %22 : vector<16x1xf32>
    %25 = arith.mulf %24, %18 : vector<16x1xf32>
    %26 = vector.shape_cast %25 : vector<16x1xf32> to vector<1x16x1xf32>
    %cst_7 = arith.constant dense<0.000000e+00> : vector<1xf32>
    %27 = vector.multi_reduction <add>, %26, %cst_7 [1, 2] : vector<1x16x1xf32> to vector<1xf32>
    %28 = vector.shape_cast %27 : vector<1xf32> to vector<1x1x1xf32>
    %29 = vector.extract %28[0, 0, 0] : f32 from vector<1x1x1xf32>
    %30 = vector.broadcast %29 : f32 to vector<1x1xf32>
    %cst_8 = arith.constant 0.000000e+00 : f32
    %31 = vector.broadcast %cst_8 : f32 to vector<8x128xf32>
    %32 = vector.broadcast %30 : vector<1x1xf32> to vector<8x128xf32>
    %33 = arith.addf %31, %32 : vector<8x128xf32>
    %c0_9 = arith.constant 0 : index
    %c0_10 = arith.constant 0 : index
    %34 = vector.load %arg3[%c0_9, %c0_10] : memref<8x128xf32, #tpu.memory_space<vmem>>, vector<8x128xf32>
    tpu.vector_store %arg3[%c0_9, %c0_10], %33 {strides = array<i32>} : memref<8x128xf32, #tpu.memory_space<vmem>>, vector<8x128xf32>,
    return
  }
  func.func @transform_0(%arg0: i32) -> (i32, i32) {
    %c0_i32 = arith.constant 0 : i32
    %c0_i32_0 = arith.constant 0 : i32
    return %arg0, %c0_i32 : i32, i32
  }
  func.func @transform_1(%arg0: i32) -> (i32, i32) {
    %c0_i32 = arith.constant 0 : i32
    %c0_i32_0 = arith.constant 0 : i32
    return %arg0, %c0_i32 : i32, i32
  }
  func.func @transform_2(%arg0: i32) -> (i32, i32) {
    %c0_i32 = arith.constant 0 : i32
    %c0_i32_0 = arith.constant 0 : i32
    return %arg0, %c0_i32 : i32, i32
  }
}

</mosaic_0001>

<llo_original>
// kernel: tpu_custom_call.1
$region0: #{tpu_custom_call.1}
  #allocation0 [shape = 'u32[]', space=smem, size = 0x4, offset = 0x4, fixed_abs, tag = 'smem constant byte address 0x4 - core index']
  #allocation1 [shape = 'u32[72,128]{1,0:T(1,128)}', space=vmem, size = 0x9000, scoped, tag = 'internal scratch']
  %s0 = inlined_call_operand.vmem [shape: f32[16,8], index: 0, kind: input, shape index: {}]
  %s1 = inlined_call_operand.vmem [shape: s32[16,1], index: 1, kind: input, shape index: {}]
  %s2 = inlined_call_operand.hbm [shape: f32[8,128], index: 2, kind: output, shape index: {}]
  %s3 = sld [smem:[#allocation0]]
  $region18: #{tpu_custom_call.1} parent=0
    _
  %s5 = ssub.s32 1, %s3
  %s6 = scalar_select 0, %s5, %s3
  $region1: #{tpu_custom_call.1} parent=0
    #allocation2 [shape = 'u8[4096]{0}', space=vmem, size = 0x1000, scoped, tag = 'output window, operand 0, single buffered']
    #allocation3 [shape = 's32[1]{0}', space=sflag, size = 0x4, scoped, tag = 'scoped memory for tpu_custom_call.1']
    %7 = vsyncpa [#allocation3], 0
    // Predicated region
    $region2: #{tpu_custom_call.1} parent=1 // pred_check
      _
    $region3: #{tpu_custom_call.1} parent=1 // pred_check_branch
      %9 = sbr.rel (0) target = $region5
    $region4: #{tpu_custom_call.1} parent=1 // pred_region
      _
    $region5: #{tpu_custom_call.1} parent=1 // pred_fallthru
      _
    // Predicated region
    $region6: #{tpu_custom_call.1} parent=1 // pred_check
      _
    $region7: #{tpu_custom_call.1} parent=1 // pred_check_branch
      %11 = sbr.rel (0) target = $region9
    $region8: #{tpu_custom_call.1} parent=1 // pred_region
      _
    $region9: #{tpu_custom_call.1} parent=1 // pred_fallthru
      _
    %v12 = vld [vmem:[%s0] sm:$0xff]
    %v13 = vld [vmem:[%s0 + $0x8] sm:$0xff]
    %v14 = vld [vmem:[%s1] sm:$0xff]
    %v15 = vld [vmem:[%s1 + $0x8] sm:$0xff]
    %vm16 = vcmask 64512
    %v17 = vsel %vm16, %v12, -inf
    %18 = vmax.xlane.f32.xlu0 %v17
    %v19 = vpop.xlane.xlu0 %18
    %v20 = vsel %vm16, %v13, -inf
    %21 = vmax.xlane.f32.xlu0 %v20
    %v22 = vpop.xlane.xlu0 %21
    %v23 = vsub.f32 %v12, %v19
    %v24 = vsub.f32 %v13, %v22
    %v25 = vmul.f32 %v23, 1.442695
    %v26 = vpow.pop %v25
    %v27 = vmul.f32 %v24, 1.442695
    %v28 = vpow.pop %v27
    %v29 = vsel %vm16, %v26, 0.0
    %30 = vadd.xlane.f32.xlu0 %v29
    %v31 = vpop.xlane.xlu0 %30
    %v32 = vsel %vm16, %v28, 0.0
    %33 = vadd.xlane.f32.xlu0 %v32
    %v34 = vpop.xlane.xlu0 %33
    %v35 = vlog2.pop %v31
    %v36 = vmul.f32 %v35, 0.6931472
    %v37 = vlog2.pop %v34
    %v38 = vmul.f32 %v37, 0.6931472
    %v39 = vlaneseq
    %v40 = vand.u32 %v39, 127
    %41 = vset.pattern.permute.xlu0 0
    %42 = vperm.xlu0 %41, %v14
    %v43 = vpop.permute.xlu0 %42
    %44 = vset.pattern.permute.xlu0 0
    %45 = vperm.xlu0 %44, %v15
    %v46 = vpop.permute.xlu0 %45
    %vm47 = vcmp.eq.s32.totalorder %v40, %v43
    %vm48 = vcmp.eq.s32.totalorder %v40, %v46
    %v49 = vsel %vm47, 1, 0
    %v50 = vsel %vm48, 1, 0
    %v51 = vcvt.s32.f32 %v49
    %v52 = vcvt.s32.f32 %v50
    %v53 = vmul.f32 %v51, %v23
    %v54 = vmul.f32 %v52, %v24
    %v55 = vsel %vm16, %v53, 0.0
    %56 = vadd.xlane.f32.xlu0 %v55
    %v57 = vpop.xlane.xlu0 %56
    %v58 = vsel %vm16, %v54, 0.0
    %59 = vadd.xlane.f32.xlu0 %v58
    %v60 = vpop.xlane.xlu0 %59
    %v61 = vsub.f32 %v57, %v36
    %v62 = vsub.f32 %v60, %v38
    %v63 = vmul.f32 %v61, 1.442695
    %v64 = vpow.pop %v63
    %v65 = vmul.f32 %v62, 1.442695
    %v66 = vpow.pop %v65
    %v67 = vsub.f32 1.0, %v64
    %v68 = vsub.f32 1.0, %v66
    %v69 = vmul.f32 %v67, %v67
    %v70 = vmul.f32 %v68, %v68
    %v71 = vsub.f32 0.0, %v69
    %v72 = vsub.f32 0.0, %v70
    %v73 = vmul.f32 %v71, %v61
    %v74 = vmul.f32 %v72, %v62
    %vm75 = vcmask 7168
    %v76 = vsel %vm75, %v73, 0.0
    %v77 = vsel %vm75, %v74, 0.0
    %v78 = vadd.f32 %v76, %v77
    %79 = vadd.xlane.f32.xlu0 %v78
    %v80 = vpop.xlane.xlu0 %79
    %v81 = vrot.slane %v80, 4
    %v82 = vadd.f32 %v80, %v81
    %v83 = vrot.slane %v82, 2
    %v84 = vadd.f32 %v82, %v83
    %v85 = vrot.slane %v84, 1
    %v86 = vadd.f32 %v84, %v85
    %s87 = vtos %v86
    %v88 = vstv %s87
    %v89 = vadd.f32 %v88, 0.0
    %90 = vst [vmem:[#allocation2] sm:$0xff] %v89
    // Predicated region
    $region10: #{tpu_custom_call.1} parent=1 // pred_check
      _
    $region11: #{tpu_custom_call.1} parent=1 // pred_check_branch
      %92 = sbr.rel (0) target = $region13
    $region12: #{tpu_custom_call.1} parent=1 // pred_region
      %94 = vsyncadd [#allocation3], 0
      %s96 = sshll.u32 [#allocation2], 4
      %s97 = int_to_ptr.vmem [resolvable:$true] %s96
      %s98 = sshll.u32 %s2, 4
      %s99 = int_to_ptr.hbm [resolvable:$true] %s98
      %101 = dma.vmem_to_hbm [thread:$0]  %s97, 128, %s99, [#allocation3]
    $region13: #{tpu_custom_call.1} parent=1 // pred_fallthru
      _
    // Predicated region
    $region14: #{tpu_custom_call.1} parent=1 // pred_check
      _
    $region15: #{tpu_custom_call.1} parent=1 // pred_check_branch
      %103 = sbr.rel (0) target = $region17
    $region16: #{tpu_custom_call.1} parent=1 // pred_region
      %105 = dma.done [#allocation3], 128
    $region17: #{tpu_custom_call.1} parent=1 // pred_fallthru
      _
    %106 = vsyncpa [#allocation3], 1

</llo_original>
